<compile_context>
chip_gen: v5e
topology: v5e:2x2
jax: 0.10.0
libtpu: 0.0.40
codegen_flags: <defaults>
</compile_context>

<pallas_src>
import math

import jax
import jax.numpy as jnp
from jax import lax
from jax.experimental import pallas as pl
from jax.experimental.pallas import tpu as pltpu


_ONEHOT_MAX_VOCAB = 2048     # one-hot MXU gather below this vocab size
_MAX_DMA_IN_FLIGHT = 8       # HBM-gather path: concurrent row DMAs
_VMEM_HEADROOM = 2 << 20     # bytes left free for compiler temporaries


def _pick_block_tokens(n_tok: int, row_mult: int, max_block_tokens: int):
    """Token block size T: multiple of row_mult, <= max_block_tokens, dividing
    n_tok exactly when possible (no padding / no wrapper slice) and leaving at
    least two grid steps so megacore (v7x) has work for both TensorCores."""
    max_t = max(row_mult, (max_block_tokens // row_mult) * row_mult)
    limit = min(max_t, n_tok)
    divisors = [c for c in range(row_mult, limit + 1, row_mult) if n_tok % c == 0]
    if divisors:
        multi = [c for c in divisors if n_tok // c >= 2]
        t = max(multi) if multi else max(divisors)
        return t, n_tok // t, n_tok
    # No exact divisor: pad the flattened token axis up to a multiple of T.
    t = min(max_t, ((n_tok + row_mult - 1) // row_mult) * row_mult)
    n_blocks = pl.cdiv(n_tok, t)
    return t, n_blocks, n_blocks * t


def _vmem_budget_bytes() -> int:
    """~85% of per-core VMEM (generation-aware: 128 MiB v5e/v6e, 64 MiB v7x)."""
    try:
        cap = int(pltpu.get_tpu_info().vmem_capacity_bytes)
    except Exception:
        cap = 64 << 20  # conservative fallback = v7x per-TensorCore VMEM
    return int(cap * 0.85)


def _make_onehot_kernel(vocab: int, scale: float):
    """Gather-as-matmul: ids (T,1) VMEM block, table fully resident in VMEM."""

    def kernel(ids_ref, table_ref, out_ref):
        t = out_ref.shape[0]
        onehot = (
            lax.broadcasted_iota(jnp.int32, (t, vocab), 1) == ids_ref[...]
        ).astype(table_ref.dtype)
        precision = (
            lax.Precision.HIGHEST if table_ref.dtype == jnp.float32 else None
        )
        acc = jnp.dot(
            onehot,
            table_ref[...],
            preferred_element_type=jnp.float32,
            precision=precision,
        )
        # Single dense scale + single dense (T, d_model) store.
        out_ref[...] = (acc * scale).astype(out_ref.dtype)

    return kernel


def _make_gather_kernel(block_tokens: int, group: int, scale: float):
    """Row gather from a VMEM-resident table; one dense store per `group` rows."""
    n_groups = block_tokens // group

    def kernel(ids_ref, table_ref, out_ref):
        # ids_ref: (T,) int32 SMEM tile; table_ref: (vocab, d_model) VMEM resident.
        def body(g, carry):
            base = pl.multiple_of(g * group, group)
            rows = [table_ref[pl.ds(ids_ref[base + r], 1), :] for r in range(group)]
            blk = jnp.concatenate(rows, axis=0)          # dense (group, d_model)
            out_ref[pl.ds(base, group), :] = (
                blk.astype(jnp.float32) * scale
            ).astype(out_ref.dtype)                      # one unmasked store per group
            return carry

        lax.fori_loop(0, n_groups, body, 0, unroll=n_groups <= 8)

    return kernel


def _make_hbm_gather_kernel(block_tokens: int, scale: float):
    """Table stays in HBM; per-token row DMAs straight into the output block."""
    n_inflight = min(_MAX_DMA_IN_FLIGHT, block_tokens)

    def kernel(ids_ref, table_hbm, out_ref, sems):
        # ids_ref: (T,) int32 SMEM tile; table_hbm: (vocab, d_model) in HBM (ANY).
        def row_copy(src_row, t, slot):
            return pltpu.make_async_copy(
                table_hbm.at[pl.ds(src_row, 1), :],
                out_ref.at[pl.ds(t, 1), :],
                sems.at[slot],
            )

        def start(t):
            row_copy(ids_ref[t], t, t % n_inflight).start()

        @pl.loop(0, n_inflight)
        def _(t):
            start(t)

        @pl.loop(0, block_tokens)
        def _(t):
            row_copy(0, t, t % n_inflight).wait()

            @pl.when(t + n_inflight < block_tokens)
            def _():
                start(t + n_inflight)

        # Dense scale once, after all row DMAs have landed.
        out_ref[...] = (out_ref[...].astype(jnp.float32) * scale).astype(out_ref.dtype)

    return kernel


def input_embeddings(ids: jax.Array, table: jax.Array, *, max_block_tokens: int = 512) -> jax.Array:
    """Pallas equivalent of `nn.Embedding(vocab, d_model)(ids) * sqrt(d_model)`."""
    B, S = ids.shape
    vocab, d_model = table.shape
    n_tok = B * S
    scale = float(math.sqrt(d_model))
    itemsize = jnp.dtype(table.dtype).itemsize
    row_mult = max(8, 32 // max(itemsize, 1))   # f32 -> 8 sublanes, bf16 -> 16

    t_blk, n_blocks, n_pad = _pick_block_tokens(n_tok, row_mult, max_block_tokens)

    # PyTorch raises on out-of-range ids; here they are clamped (deliberately)
    # to avoid out-of-bounds VMEM/HBM reads.
    ids_flat = jnp.clip(ids.reshape(-1).astype(jnp.int32), 0, vocab - 1)
    if n_pad > n_tok:
        ids_flat = jnp.pad(ids_flat, (0, n_pad - n_tok))

    vmem_budget = _vmem_budget_bytes()
    table_bytes = vocab * d_model * itemsize
    out_blk_bytes = t_blk * d_model * itemsize
    use_onehot = vocab <= _ONEHOT_MAX_VOCAB
    # Single resident table copy + double-buffered output blocks + ids tiles
    # + one-hot / f32-accumulator temporaries.
    resident_bytes = (
        table_bytes
        + 2 * out_blk_bytes
        + 2 * t_blk * 4
        + (t_blk * vocab * 4 + t_blk * d_model * 4 if use_onehot else 0)
        + _VMEM_HEADROOM
    )
    resident = resident_bytes <= vmem_budget
    # TODO(synk): also route to the HBM path when n_tok << vocab (decode), where
    # full-table residency wastes HBM read bandwidth versus per-row DMAs.

    if resident:
        vmem_needed = resident_bytes
    else:
        vmem_needed = 2 * out_blk_bytes + t_blk * d_model * 4 + _VMEM_HEADROOM
    vmem_limit = int(min(vmem_budget, max(vmem_needed, 32 << 20)))

    if resident and use_onehot:
        kernel = _make_onehot_kernel(vocab, scale)
        ids_in = ids_flat.reshape(n_pad, 1)
        in_specs = [
            pl.BlockSpec((t_blk, 1), lambda i: (i, 0)),
            # memory_space-only spec: whole table mapped into VMEM once and not
            # pipelined -> a single resident copy (no 2x double-buffering).
            pl.BlockSpec(memory_space=pltpu.MemorySpace.VMEM),
        ]
        scratch_shapes = ()
    elif resident:
        kernel = _make_gather_kernel(t_blk, row_mult, scale)
        ids_in = ids_flat
        in_specs = [
            pl.BlockSpec((t_blk,), lambda i: (i,), memory_space=pltpu.MemorySpace.SMEM),
            pl.BlockSpec(memory_space=pltpu.MemorySpace.VMEM),
        ]
        scratch_shapes = ()
    else:
        kernel = _make_hbm_gather_kernel(t_blk, scale)
        ids_in = ids_flat
        in_specs = [
            pl.BlockSpec((t_blk,), lambda i: (i,), memory_space=pltpu.MemorySpace.SMEM),
            pl.BlockSpec(memory_space=pl.ANY),   # table stays in HBM, rows DMA'd
        ]
        scratch_shapes = (pltpu.SemaphoreType.DMA((min(_MAX_DMA_IN_FLIGHT, t_blk),)),)

    out_flat = pl.pallas_call(
        kernel,
        out_shape=jax.ShapeDtypeStruct((n_pad, d_model), table.dtype),
        grid=(n_blocks,),
        in_specs=in_specs,
        out_specs=pl.BlockSpec((t_blk, d_model), lambda i: (i, 0)),
        scratch_shapes=scratch_shapes,
        compiler_params=pltpu.CompilerParams(
            dimension_semantics=("parallel",),
            vmem_limit_bytes=vmem_limit,
        ),
    )(ids_in, table)

    if n_pad != n_tok:
        out_flat = out_flat[:n_tok]
    return out_flat.reshape(B, S, d_model)


if __name__ == "__main__":
    # Small, deterministic setup consistent with the module's forward shapes.
    d_model = 128
    vocab_size = 64
    B, S = 2, 8

    key = jax.random.PRNGKey(0)
    k_ids, k_emb = jax.random.split(key)

    # Deterministic "parameters": embedding table (vocab_size, d_model),
    # matching nn.Embedding's default N(0, 1) init.
    table = jax.random.normal(k_emb, (vocab_size, d_model), dtype=jnp.float32)
    x = jax.random.randint(k_ids, (B, S), minval=0, maxval=vocab_size, dtype=jnp.int32)

    out = jax.block_until_ready(input_embeddings(x, table))

    # Reference check against plain-JAX gather.
    ref = table[x] * math.sqrt(d_model)
    assert out.shape == (B, S, d_model), out.shape
    assert jnp.allclose(out, ref, atol=1e-5, rtol=1e-5), "mismatch vs reference"

    print("KERNEL_OK")
</pallas_src>

<mosaic_0001>
module attributes {stable_mosaic.version = 11 : i64} {
  func.func @kernel(%arg0: i32, %arg1: memref<8x1xi32, #tpu.memory_space<vmem>>, %arg2: memref<64x128xf32, #tpu.memory_space<vmem>>, %arg3: memref<8x128xf32, #tpu.memory_space<vmem>>) attributes {dimension_semantics = [#tpu.dimension_semantics<parallel>], iteration_bounds = array<i64: 2>, scalar_prefetch = 0 : i64, scratch_operands = 0 : i64, tpu.core_type = #tpu.core_type<tc>, window_params = [{transform_indices = @transform_0, window_bounds = array<i64: 8, 1>}, {pipeline_mode = #tpu.pipeline_mode<synchronous>, transform_indices = @transform_1, window_bounds = array<i64: 64, 128>}, {transform_indices = @transform_2, window_bounds = array<i64: 8, 128>}]} {
    %0 = tpu.iota {dimensions = array<i32: 1>} : vector<8x64xi32>
    %c0 = arith.constant 0 : index
    %c0_0 = arith.constant 0 : index
    %1 = vector.load %arg1[%c0, %c0_0] : memref<8x1xi32, #tpu.memory_space<vmem>>, vector<8x1xi32>
    %2 = vector.broadcast %1 : vector<8x1xi32> to vector<8x64xi32>
    %3 = arith.cmpi eq, %0, %2 : vector<8x64xi32>
    %4 = arith.extui %3 : vector<8x64xi1> to vector<8x64xi32>
    %5 = arith.sitofp %4 : vector<8x64xi32> to vector<8x64xf32>
    %c0_1 = arith.constant 0 : index
    %c0_2 = arith.constant 0 : index
    %6 = vector.load %arg2[%c0_1, %c0_2] : memref<64x128xf32, #tpu.memory_space<vmem>>, vector<64x128xf32>
    %cst = arith.constant dense<0.000000e+00> : vector<8x128xf32>
    %7 = tpu.matmul %5, %6, %cst {dimension_numbers = #tpu.dot_dimension_numbers<[1], [0], [0], [1], [0, 0, 1, 1], [], []>, precision = #tpu.contract_precision<fp32>} : vector<8x64xf32>, vector<64x128xf32>, vector<8x128xf32> -> vector<8x128xf32>
    %cst_3 = arith.constant 11.3137083 : f32
    %8 = vector.broadcast %cst_3 : f32 to vector<8x128xf32>
    %9 = arith.mulf %7, %8 : vector<8x128xf32>
    %c0_4 = arith.constant 0 : index
    %c0_5 = arith.constant 0 : index
    %10 = vector.load %arg3[%c0_4, %c0_5] : memref<8x128xf32, #tpu.memory_space<vmem>>, vector<8x128xf32>
    tpu.vector_store %arg3[%c0_4, %c0_5], %9 {strides = array<i32>} : memref<8x128xf32, #tpu.memory_space<vmem>>, vector<8x128xf32>,
    return
  }
  func.func @transform_0(%arg0: i32) -> (i32, i32) {
    %c0_i32 = arith.constant 0 : i32
    %c0_i32_0 = arith.constant 0 : i32
    return %arg0, %c0_i32 : i32, i32
  }
  func.func @transform_1(%arg0: i32) -> (i32, i32) {
    %c0_i32 = arith.constant 0 : i32
    %c0_i32_0 = arith.constant 0 : i32
    %c0_i32_1 = arith.constant 0 : i32
    return %c0_i32, %c0_i32_0 : i32, i32
  }
  func.func @transform_2(%arg0: i32) -> (i32, i32) {
    %c0_i32 = arith.constant 0 : i32
    %c0_i32_0 = arith.constant 0 : i32
    return %arg0, %c0_i32 : i32, i32
  }
}

</mosaic_0001>

<llo_original>
// kernel: tpu_custom_call.1
$region0: #{tpu_custom_call.1}
  #allocation0 [shape = 'u32[]', space=smem, size = 0x4, offset = 0x4, fixed_abs, tag = 'smem constant byte address 0x4 - core index']
  #allocation1 [shape = 'u32[72,128]{1,0:T(1,128)}', space=vmem, size = 0x9000, scoped, tag = 'internal scratch']
  %s0 = inlined_call_operand.vmem [shape: s32[16,1], index: 0, kind: input, shape index: {}]
  %s1 = inlined_call_operand.hbm [shape: f32[64,128], index: 1, kind: input, shape index: {}]
  %s2 = inlined_call_operand.hbm [shape: f32[16,128], index: 2, kind: output, shape index: {}]
  %s3 = sld [smem:[#allocation0]]
  $region45: #{tpu_custom_call.1} parent=0
    _
  %s5 = ssub.s32 1, %s3
  %s6 = scalar_select 0, %s5, %s3
  $region1: #{tpu_custom_call.1} parent=0
    #allocation2 [shape = 'u8[32768]{0}', space=vmem, size = 0x8000, scoped, tag = 'input window, operand 1, single buffered']
    #allocation3 [shape = 's32[2]{0}', space=sflag, size = 0x8, scoped, tag = 'scoped memory for tpu_custom_call.1']
    #allocation4 [shape = 's32[2]{0}', space=sflag, size = 0x8, scoped, tag = 'scoped memory for tpu_custom_call.1']
    #allocation5 [shape = 'u8[8192]{0}', space=vmem, size = 0x2000, scoped, tag = 'output window, operand 0']
    %7 = vsyncpa [#allocation3], 0
    %8 = vsyncpa [#allocation4], 0
    %s9 = scalar_lea.sflag [#allocation4], 1
    %10 = vsyncpa %s9, 0
    loop: start=0, step=1, limit=4
    $region2: #{tpu_custom_call.1} parent=1 // loop_pre_header
      _
    $region3: #{tpu_custom_call.1} parent=1 // loop_header
      %s12 = sphi 0, %s16
      %p13 = scmp.ge.s32.totalorder %s12, 4
      %s22 = sphi 0, %s24
      %s25 = sphi 0, %s22
      %s26 = sphi 0, %s25
      %s42 = sphi 0, %s26
      %s46 = sphi 0, %s46
      %s48 = sphi 0, %s46
      %s49 = sphi 0, %s48
      %s63 = sphi 0, %s49
      %s69 = sphi 0, %s71
      %s72 = sphi 0, %s69
      %s73 = sphi 0, %s72
      %s89 = sphi 0, %s73
    $region4: #{tpu_custom_call.1} parent=1 // loop_header_branch
      %15 = sbr.rel (%p13) target = $region8
    $region5: #{tpu_custom_call.1} parent=1 // loop_body
      %s17 = ssub.s32 %s12, 1
      %s18 = ssub.s32 %s12, 2
      %s19 = sadd.s32 %s12, 1
      %s20 = ssub.s32 %s12, %s19
      %p21 = scmp.eq.s32.totalorder %s20, 0
      %s23 = sadd.s32 %s22, 1
      %s24 = scalar_select %p21, %s22, %s23
      %p27 = pneg %p21
      %p28 = scmp.eq.s32.totalorder %s12, 1
      %p29 = por %p27, %p28
      %p30 = scmp.ne.s32.totalorder %s22, %s25
      %p31 = scmp.eq.s32.totalorder %s12, 0
      %p32 = por %p30, %p31
      %p33 = scmp.ne.s32.totalorder %s22, %s25
      %p34 = scmp.eq.s32.totalorder %s17, 1
      %p35 = por %p33, %p34
      %p36 = scmp.ne.s32.totalorder %s25, %s26
      %p37 = scmp.eq.s32.totalorder %s17, 0
      %p38 = por %p36, %p37
      %p39 = scmp.ne.s32.totalorder %s25, %s26
      %p40 = scmp.eq.s32.totalorder %s18, 1
      %p41 = por %p39, %p40
      %p43 = scmp.ne.s32.totalorder %s26, %s42
      %p44 = scmp.eq.s32.totalorder %s18, 0
      %p45 = por %p43, %p44
      %s47 = sadd.s32 %s46, 1
      %p50 = scmp.eq.s32.totalorder %s12, 1
      %p51 = scmp.ne.s32.totalorder %s46, %s48
      %p52 = scmp.eq.s32.totalorder %s12, 0
      %p53 = por %p51, %p52
      %p54 = scmp.ne.s32.totalorder %s46, %s48
      %p55 = scmp.eq.s32.totalorder %s17, 1
      %p56 = por %p54, %p55
      %p57 = scmp.ne.s32.totalorder %s48, %s49
      %p58 = scmp.eq.s32.totalorder %s17, 0
      %p59 = por %p57, %p58
      %p60 = scmp.ne.s32.totalorder %s48, %s49
      %p61 = scmp.eq.s32.totalorder %s18, 1
      %p62 = por %p60, %p61
      %p64 = scmp.ne.s32.totalorder %s49, %s63
      %p65 = scmp.eq.s32.totalorder %s18, 0
      %p66 = por %p64, %p65
      %s67 = ssub.s32 %s12, %s19
      %p68 = scmp.eq.s32.totalorder %s67, 0
      %s70 = sadd.s32 %s69, 1
      %s71 = scalar_select %p68, %s69, %s70
      %p74 = pneg %p68
      %p75 = scmp.eq.s32.totalorder %s12, 1
      %p76 = por %p74, %p75
      %p77 = scmp.ne.s32.totalorder %s69, %s72
      %p78 = scmp.eq.s32.totalorder %s12, 0
      %p79 = por %p77, %p78
      %p80 = scmp.ne.s32.totalorder %s69, %s72
      %p81 = scmp.eq.s32.totalorder %s17, 1
      %p82 = por %p80, %p81
      %p83 = scmp.ne.s32.totalorder %s72, %s73
      %p84 = scmp.eq.s32.totalorder %s17, 0
      %p85 = por %p83, %p84
      %p86 = scmp.ne.s32.totalorder %s72, %s73
      %p87 = scmp.eq.s32.totalorder %s18, 1
      %p88 = por %p86, %p87
      %p90 = scmp.ne.s32.totalorder %s73, %s89
      %p91 = scmp.eq.s32.totalorder %s18, 0
      %p92 = por %p90, %p91
      %p93 = scmp.le.s32.totalorder 1, %s12
      %p94 = scmp.lt.s32.totalorder %s12, 3
      %p95 = pnand %p93, %p94
      %p96 = pneg %p95
      // Predicated region
      $region9: #{tpu_custom_call.1} parent=5 // pred_check
        _
      $region10: #{tpu_custom_call.1} parent=5 // pred_check_branch
        %98 = sbr.rel (%p95) target = $region12
      $region11: #{tpu_custom_call.1} parent=5 // pred_region
        %s99 = ssub.s32 %s12, 1
        // Predicated region
        $region13: #{tpu_custom_call.1} parent=11 // pred_check
          %p100 = pneg %p59
        $region14: #{tpu_custom_call.1} parent=11 // pred_check_branch
          %102 = sbr.rel (%p100) target = $region16
        $region15: #{tpu_custom_call.1} parent=11 // pred_region
          %104 = vsyncadd [#allocation3], 0
          %s105 = sshll.u32 %s1, 4
          %s106 = int_to_ptr.hbm [resolvable:$true] %s105
          %s107 = sshll.u32 [#allocation2], 4
          %s108 = int_to_ptr.vmem [resolvable:$true] %s107
          %113 = dma.hbm_to_vmem [thread:$0]  %s106, 1024, %s108, [#allocation3], 128, 128, 8
        $region16: #{tpu_custom_call.1} parent=11 // pred_fallthru
          _
      $region12: #{tpu_custom_call.1} parent=5 // pred_fallthru
        _
      %p114 = scmp.lt.s32.totalorder %s12, 2
      // Predicated region
      $region17: #{tpu_custom_call.1} parent=5 // pred_check
        %p115 = pneg %p114
      $region18: #{tpu_custom_call.1} parent=5 // pred_check_branch
        %117 = sbr.rel (%p115) target = $region20
      $region19: #{tpu_custom_call.1} parent=5 // pred_region
        // Predicated region
        $region21: #{tpu_custom_call.1} parent=19 // pred_check
          %p118 = pneg %p32
        $region22: #{tpu_custom_call.1} parent=19 // pred_check_branch
          %120 = sbr.rel (%p118) target = $region24
        $region23: #{tpu_custom_call.1} parent=19 // pred_region
          %p121 = scmp.lt.s32.totalorder %s12, 1
          %s122 = scalar_select %p121, %s12, 1
          %s123 = smul.addr %s122, 8
          %s124 = scalar_lea.vmem %s0, %s123
        $region24: #{tpu_custom_call.1} parent=19 // pred_fallthru
          _
      $region20: #{tpu_custom_call.1} parent=5 // pred_fallthru
        _
      %p125 = scmp.le.s32.totalorder 1, %s12
      %p126 = scmp.lt.s32.totalorder %s12, 3
      %p127 = pnand %p125, %p126
      %p128 = pneg %p127
      // Predicated region
      $region25: #{tpu_custom_call.1} parent=5 // pred_check
        _
      $region26: #{tpu_custom_call.1} parent=5 // pred_check_branch
        %130 = sbr.rel (%p127) target = $region28
      $region27: #{tpu_custom_call.1} parent=5 // pred_region
        %s131 = ssub.s32 %s12, 1
        // Predicated region
        $region29: #{tpu_custom_call.1} parent=27 // pred_check
          %p132 = pneg %p59
        $region30: #{tpu_custom_call.1} parent=27 // pred_check_branch
          %134 = sbr.rel (%p132) target = $region32
        $region31: #{tpu_custom_call.1} parent=27 // pred_region
          %136 = dma.done [#allocation3], 1024
        $region32: #{tpu_custom_call.1} parent=27 // pred_fallthru
          _
        %p137 = scmp.lt.s32.totalorder %s17, 1
        %s138 = scalar_select %p137, %s17, 1
        %s139 = smul.addr %s138, 8
        %s140 = scalar_lea.vmem %s0, %s139
        %p141 = pneg %p38
        %p142 = pneg %p35
        %p143 = pneg %p59
        %p144 = pneg %p56
        %p145 = pneg %p85
        %p146 = pneg %p82
        %s147 = sand.u32 %s72, 1
        %s148 = scalar_lea.sflag [#allocation4], %s147
        %s149 = sand.u32 %s72, 1
        %s150 = smul.addr %s149, 8
        %s151 = scalar_lea.vmem [#allocation5], %s150
        %p152 = scmp.lt.s32.totalorder %s17, 1
        %s153 = scalar_select %p152, %s17, 1
        %s154 = smul.addr %s153, 8
        %s155 = scalar_lea.vmem %s0, %s154
        %v156 = vlaneseq
        %v157 = vand.u32 %v156, 127
        %v158 = vld [vmem:[%s155] sm:$0xff]
        %159 = vset.pattern.permute.xlu0 0
        %160 = vperm.xlu0 %159, %v158
        %v161 = vpop.permute.xlu0 %160
        %vm162 = vcmp.eq.s32.totalorder %v157, %v161
        %v163 = vsel %vm162, 1, 0
        %v164 = vcvt.s32.f32 %v163
        %v165 = vld [vmem:[#allocation2] sm:$0xff]
        %v166 = vld [vmem:[#allocation2 + $0x8] sm:$0xff]
        %v167 = vld [vmem:[#allocation2 + $0x10] sm:$0xff]
        %v168 = vld [vmem:[#allocation2 + $0x18] sm:$0xff]
        %v169 = vld [vmem:[#allocation2 + $0x20] sm:$0xff]
        %v170 = vld [vmem:[#allocation2 + $0x28] sm:$0xff]
        %v171 = vld [vmem:[#allocation2 + $0x30] sm:$0xff]
        %v172 = vld [vmem:[#allocation2 + $0x38] sm:$0xff]
        %vm173 = vcmask 523264
        %v175 = vsel %vm173, %v164, 0
        %177 = vmatpush.msra.mxu0 0.0
        %178 = vmatpush.msra.mxu0 0.0
        %179 = vmatpush.msra.mxu0 0.0
        %180 = vmatpush.msra.mxu0 0.0
        %181 = vmatpush.msra.mxu0 0.0
        %182 = vmatpush.msra.mxu0 0.0
        %183 = vmatpush.msra.mxu0 0.0
        %184 = vmatpush.msra.mxu0 0.0
        %v185 = vand.u32 %v172, 4294901760
        %186 = vmatpush.msra.mxu0 %v185
        %v187 = vand.u32 %v171, 4294901760
        %188 = vmatpush.msra.mxu0 %v187
        %v189 = vand.u32 %v170, 4294901760
        %190 = vmatpush.msra.mxu0 %v189
        %v191 = vand.u32 %v169, 4294901760
        %192 = vmatpush.msra.mxu0 %v191
        %v193 = vand.u32 %v168, 4294901760
        %194 = vmatpush.msra.mxu0 %v193
        %v195 = vand.u32 %v167, 4294901760
        %196 = vmatpush.msra.mxu0 %v195
        %v197 = vand.u32 %v166, 4294901760
        %198 = vmatpush.msra.mxu0 %v197
        %v199 = vand.u32 %v165, 4294901760
        %200 = vmatpush.msra.mxu0 %v199
        %v201 = vand.u32 %v175, 4294901760
        %v202 = vsub.f32 %v175, %v201
        %v203 = vand.u32 %v202, 4294901760
        %v204 = vsub.f32 %v202, %v203
        %v205 = vand.u32 %v204, 4294901760
        %206 = vmatmul.f32.gmra.mxu0 %v205
        %v207 = vpop.f32.mrf.mxu0
        %v208 = vadd.f32 0.0, %v207
        %209 = vdwg.mxu0
        %210 = vmatpush.msra.mxu0 0.0
        %211 = vmatpush.msra.mxu0 0.0
        %212 = vmatpush.msra.mxu0 0.0
        %213 = vmatpush.msra.mxu0 0.0
        %214 = vmatpush.msra.mxu0 0.0
        %215 = vmatpush.msra.mxu0 0.0
        %216 = vmatpush.msra.mxu0 0.0
        %217 = vmatpush.msra.mxu0 0.0
        %v218 = vand.u32 %v172, 4294901760
        %v219 = vsub.f32 %v172, %v218
        %v220 = vand.u32 %v219, 4294901760
        %v221 = vsub.f32 %v219, %v220
        %v222 = vand.u32 %v221, 4294901760
        %223 = vmatpush.msra.mxu0 %v222
        %v224 = vand.u32 %v171, 4294901760
        %v225 = vsub.f32 %v171, %v224
        %v226 = vand.u32 %v225, 4294901760
        %v227 = vsub.f32 %v225, %v226
        %v228 = vand.u32 %v227, 4294901760
        %229 = vmatpush.msra.mxu0 %v228
        %v230 = vand.u32 %v170, 4294901760
        %v231 = vsub.f32 %v170, %v230
        %v232 = vand.u32 %v231, 4294901760
        %v233 = vsub.f32 %v231, %v232
        %v234 = vand.u32 %v233, 4294901760
        %235 = vmatpush.msra.mxu0 %v234
        %v236 = vand.u32 %v169, 4294901760
        %v237 = vsub.f32 %v169, %v236
        %v238 = vand.u32 %v237, 4294901760
        %v239 = vsub.f32 %v237, %v238
        %v240 = vand.u32 %v239, 4294901760
        %241 = vmatpush.msra.mxu0 %v240
        %v242 = vand.u32 %v168, 4294901760
        %v243 = vsub.f32 %v168, %v242
        %v244 = vand.u32 %v243, 4294901760
        %v245 = vsub.f32 %v243, %v244
        %v246 = vand.u32 %v245, 4294901760
        %247 = vmatpush.msra.mxu0 %v246
        %v248 = vand.u32 %v167, 4294901760
        %v249 = vsub.f32 %v167, %v248
        %v250 = vand.u32 %v249, 4294901760
        %v251 = vsub.f32 %v249, %v250
        %v252 = vand.u32 %v251, 4294901760
        %253 = vmatpush.msra.mxu0 %v252
        %v254 = vand.u32 %v166, 4294901760
        %v255 = vsub.f32 %v166, %v254
        %v256 = vand.u32 %v255, 4294901760
        %v257 = vsub.f32 %v255, %v256
        %v258 = vand.u32 %v257, 4294901760
        %259 = vmatpush.msra.mxu0 %v258
        %v260 = vand.u32 %v165, 4294901760
        %v261 = vsub.f32 %v165, %v260
        %v262 = vand.u32 %v261, 4294901760
        %v263 = vsub.f32 %v261, %v262
        %v264 = vand.u32 %v263, 4294901760
        %265 = vmatpush.msra.mxu0 %v264
        %v266 = vand.u32 %v175, 4294901760
        %267 = vmatmul.f32.gmra.mxu0 %v266
        %v268 = vpop.f32.mrf.mxu0
        %v269 = vadd.f32 %v208, %v268
        %270 = vdwg.mxu0
        %271 = vmatpush.msra.mxu0 0.0
        %272 = vmatpush.msra.mxu0 0.0
        %273 = vmatpush.msra.mxu0 0.0
        %274 = vmatpush.msra.mxu0 0.0
        %275 = vmatpush.msra.mxu0 0.0
        %276 = vmatpush.msra.mxu0 0.0
        %277 = vmatpush.msra.mxu0 0.0
        %278 = vmatpush.msra.mxu0 0.0
        %v279 = vand.u32 %v172, 4294901760
        %v280 = vsub.f32 %v172, %v279
        %281 = vmatpush.msra.mxu0 %v280
        %v282 = vand.u32 %v171, 4294901760
        %v283 = vsub.f32 %v171, %v282
        %284 = vmatpush.msra.mxu0 %v283
        %v285 = vand.u32 %v170, 4294901760
        %v286 = vsub.f32 %v170, %v285
        %287 = vmatpush.msra.mxu0 %v286
        %v288 = vand.u32 %v169, 4294901760
        %v289 = vsub.f32 %v169, %v288
        %290 = vmatpush.msra.mxu0 %v289
        %v291 = vand.u32 %v168, 4294901760
        %v292 = vsub.f32 %v168, %v291
        %293 = vmatpush.msra.mxu0 %v292
        %v294 = vand.u32 %v167, 4294901760
        %v295 = vsub.f32 %v167, %v294
        %296 = vmatpush.msra.mxu0 %v295
        %v297 = vand.u32 %v166, 4294901760
        %v298 = vsub.f32 %v166, %v297
        %299 = vmatpush.msra.mxu0 %v298
        %v300 = vand.u32 %v165, 4294901760
        %v301 = vsub.f32 %v165, %v300
        %302 = vmatpush.msra.mxu0 %v301
        %v303 = vand.u32 %v175, 4294901760
        %v304 = vsub.f32 %v175, %v303
        %305 = vmatmul.f32.gmra.mxu0 %v304
        %v306 = vpop.f32.mrf.mxu0
        %v307 = vadd.f32 %v269, %v306
        %308 = vdwg.mxu0
        %309 = vmatpush.msra.mxu0 0.0
        %310 = vmatpush.msra.mxu0 0.0
        %311 = vmatpush.msra.mxu0 0.0
        %312 = vmatpush.msra.mxu0 0.0
        %313 = vmatpush.msra.mxu0 0.0
        %314 = vmatpush.msra.mxu0 0.0
        %315 = vmatpush.msra.mxu0 0.0
        %316 = vmatpush.msra.mxu0 0.0
        %v317 = vand.u32 %v172, 4294901760
        %318 = vmatpush.msra.mxu0 %v317
        %v319 = vand.u32 %v171, 4294901760
        %320 = vmatpush.msra.mxu0 %v319
        %v321 = vand.u32 %v170, 4294901760
        %322 = vmatpush.msra.mxu0 %v321
        %v323 = vand.u32 %v169, 4294901760
        %324 = vmatpush.msra.mxu0 %v323
        %v325 = vand.u32 %v168, 4294901760
        %326 = vmatpush.msra.mxu0 %v325
        %v327 = vand.u32 %v167, 4294901760
        %328 = vmatpush.msra.mxu0 %v327
        %v329 = vand.u32 %v166, 4294901760
        %330 = vmatpush.msra.mxu0 %v329
        %v331 = vand.u32 %v165, 4294901760
        %332 = vmatpush.msra.mxu0 %v331
        %v333 = vand.u32 %v175, 4294901760
        %v334 = vsub.f32 %v175, %v333
        %v335 = vand.u32 %v334, 4294901760
        %336 = vmatmul.f32.gmra.mxu0 %v335
        %v337 = vpop.f32.mrf.mxu0
        %v338 = vadd.f32 %v307, %v337
        %339 = vdwg.mxu0
        %340 = vmatpush.msra.mxu0 0.0
        %341 = vmatpush.msra.mxu0 0.0
        %342 = vmatpush.msra.mxu0 0.0
        %343 = vmatpush.msra.mxu0 0.0
        %344 = vmatpush.msra.mxu0 0.0
        %345 = vmatpush.msra.mxu0 0.0
        %346 = vmatpush.msra.mxu0 0.0
        %347 = vmatpush.msra.mxu0 0.0
        %v348 = vand.u32 %v172, 4294901760
        %v349 = vsub.f32 %v172, %v348
        %v350 = vand.u32 %v349, 4294901760
        %351 = vmatpush.msra.mxu0 %v350
        %v352 = vand.u32 %v171, 4294901760
        %v353 = vsub.f32 %v171, %v352
        %v354 = vand.u32 %v353, 4294901760
        %355 = vmatpush.msra.mxu0 %v354
        %v356 = vand.u32 %v170, 4294901760
        %v357 = vsub.f32 %v170, %v356
        %v358 = vand.u32 %v357, 4294901760
        %359 = vmatpush.msra.mxu0 %v358
        %v360 = vand.u32 %v169, 4294901760
        %v361 = vsub.f32 %v169, %v360
        %v362 = vand.u32 %v361, 4294901760
        %363 = vmatpush.msra.mxu0 %v362
        %v364 = vand.u32 %v168, 4294901760
        %v365 = vsub.f32 %v168, %v364
        %v366 = vand.u32 %v365, 4294901760
        %367 = vmatpush.msra.mxu0 %v366
        %v368 = vand.u32 %v167, 4294901760
        %v369 = vsub.f32 %v167, %v368
        %v370 = vand.u32 %v369, 4294901760
        %371 = vmatpush.msra.mxu0 %v370
        %v372 = vand.u32 %v166, 4294901760
        %v373 = vsub.f32 %v166, %v372
        %v374 = vand.u32 %v373, 4294901760
        %375 = vmatpush.msra.mxu0 %v374
        %v376 = vand.u32 %v165, 4294901760
        %v377 = vsub.f32 %v165, %v376
        %v378 = vand.u32 %v377, 4294901760
        %379 = vmatpush.msra.mxu0 %v378
        %v380 = vand.u32 %v175, 4294901760
        %381 = vmatmul.f32.gmra.mxu0 %v380
        %v382 = vpop.f32.mrf.mxu0
        %v383 = vadd.f32 %v338, %v382
        %384 = vdwg.mxu0
        %385 = vmatpush.msra.mxu0 0.0
        %386 = vmatpush.msra.mxu0 0.0
        %387 = vmatpush.msra.mxu0 0.0
        %388 = vmatpush.msra.mxu0 0.0
        %389 = vmatpush.msra.mxu0 0.0
        %390 = vmatpush.msra.mxu0 0.0
        %391 = vmatpush.msra.mxu0 0.0
        %392 = vmatpush.msra.mxu0 0.0
        %v393 = vand.u32 %v172, 4294901760
        %394 = vmatpush.msra.mxu0 %v393
        %v395 = vand.u32 %v171, 4294901760
        %396 = vmatpush.msra.mxu0 %v395
        %v397 = vand.u32 %v170, 4294901760
        %398 = vmatpush.msra.mxu0 %v397
        %v399 = vand.u32 %v169, 4294901760
        %400 = vmatpush.msra.mxu0 %v399
        %v401 = vand.u32 %v168, 4294901760
        %402 = vmatpush.msra.mxu0 %v401
        %v403 = vand.u32 %v167, 4294901760
        %404 = vmatpush.msra.mxu0 %v403
        %v405 = vand.u32 %v166, 4294901760
        %406 = vmatpush.msra.mxu0 %v405
        %v407 = vand.u32 %v165, 4294901760
        %408 = vmatpush.msra.mxu0 %v407
        %v409 = vand.u32 %v175, 4294901760
        %410 = vmatmul.f32.gmra.mxu0 %v409
        %v411 = vpop.f32.mrf.mxu0
        %v412 = vadd.f32 %v383, %v411
        %413 = vdwg.mxu0
        %v414 = vmul.f32 %v412, 11.313708
        %415 = vst [vmem:[%s151] sm:$0xff] %v414
        %s416 = sand.u32 %s72, 1
        %s417 = scalar_lea.sflag [#allocation4], %s416
        %s418 = sand.u32 %s72, 1
        %s419 = smul.addr %s418, 8
        %s420 = scalar_lea.vmem [#allocation5], %s419
        // Predicated region
        $region33: #{tpu_custom_call.1} parent=27 // pred_check
          %p421 = pneg %p82
        $region34: #{tpu_custom_call.1} parent=27 // pred_check_branch
          %423 = sbr.rel (%p421) target = $region36
        $region35: #{tpu_custom_call.1} parent=27 // pred_region
          %425 = vsyncadd %s417, 0
          %s426 = smul.addr %s17, 8
          %s427 = scalar_lea.hbm %s2, %s426
          %s429 = sshll.u32 %s420, 4
          %s430 = int_to_ptr.vmem [resolvable:$true] %s429
          %s431 = sshll.u32 %s427, 4
          %s432 = int_to_ptr.hbm [resolvable:$true] %s431
          %434 = dma.vmem_to_hbm [thread:$0]  %s430, 128, %s432, %s417
        $region36: #{tpu_custom_call.1} parent=27 // pred_fallthru
          _
      $region28: #{tpu_custom_call.1} parent=5 // pred_fallthru
        _
      %p435 = scmp.le.s32.totalorder 2, %s12
      // Predicated region
      $region37: #{tpu_custom_call.1} parent=5 // pred_check
        %p436 = pneg %p435
      $region38: #{tpu_custom_call.1} parent=5 // pred_check_branch
        %438 = sbr.rel (%p436) target = $region40
      $region39: #{tpu_custom_call.1} parent=5 // pred_region
        %s439 = ssub.s32 %s12, 2
        // Predicated region
        $region41: #{tpu_custom_call.1} parent=39 // pred_check
          %p440 = pneg %p88
        $region42: #{tpu_custom_call.1} parent=39 // pred_check_branch
          %442 = sbr.rel (%p440) target = $region44
        $region43: #{tpu_custom_call.1} parent=39 // pred_region
          %s443 = sand.u32 %s73, 1
          %s444 = scalar_lea.sflag [#allocation4], %s443
          %s445 = sand.u32 %s73, 1
          %s446 = smul.addr %s445, 8
          %s447 = scalar_lea.vmem [#allocation5], %s446
          %449 = dma.done %s444, 128
        $region44: #{tpu_custom_call.1} parent=39 // pred_fallthru
          _
      $region40: #{tpu_custom_call.1} parent=5 // pred_fallthru
        _
    $region6: #{tpu_custom_call.1} parent=1 // loop_footer
      %s16 = sadd.s32 1, %s12
    $region7: #{tpu_custom_call.1} parent=1 // loop_footer_branch
      %11 = sbr.rel target = $region3
    $region8: #{tpu_custom_call.1} parent=1 // loop_exit
      _
    %450 = vsyncpa [#allocation3], 1
    %s451 = scalar_lea.sflag [#allocation3], 1
    %452 = vsyncpa %s451, 1
    %453 = vsyncpa [#allocation4], 1
    %s454 = scalar_lea.sflag [#allocation4], 1
    %455 = vsyncpa %s454, 1

</llo_original>
